<compile_context>
chip_gen: v7x
topology: tpu7x:2x2x1
jax: 0.10.0
libtpu: 0.0.40
codegen_flags: <defaults>
</compile_context>

<pallas_src>
import functools

import jax
import jax.numpy as jnp
from jax.experimental import pallas as pl
from jax.experimental.pallas import tpu as pltpu

PACK = 4  # batch rows packed per lane row (block-diagonal weight replication)


def _apply_act(y, act):
    if act == "silu":
        return y * jax.nn.sigmoid(y)
    if act == "relu":
        return jnp.maximum(y, 0.0)
    if act == "sigmoid":
        return jax.nn.sigmoid(y)
    if act == "tanh":
        return jnp.tanh(y)
    if act is None or act == "linear":
        return y
    raise ValueError(f"unknown activation: {act!r}")


def _ann_fused_kernel(x_ref, w_in_ref, b_in_ref, w_h_ref, b_h_ref,
                      w_out_ref, b_out_ref, o_ref, *,
                      act, out_act, scale, n_hidden, matmul_dtype):
    """Entire MLP on one packed batch tile: all matmuls + activations fused.

    MXU operands are `matmul_dtype` (bf16 by default), accumulation and all
    VPU/EUP work (bias add, sigmoid/tanh/silu) stays f32.
    """
    # input layer
    h = jnp.dot(x_ref[...], w_in_ref[...], preferred_element_type=jnp.float32)
    h = _apply_act(h + b_in_ref[...], act)
    # hidden layers: tiny fixed trip count -> static unroll so MXU pushes
    # interleave with EUP activation work.
    for l in range(n_hidden):
        z = jnp.dot(h.astype(matmul_dtype), w_h_ref[l],
                    preferred_element_type=jnp.float32)
        h = _apply_act(z + b_h_ref[l], act)
    # output layer (+ optional tanh + scale); 32-lane (packed) store.
    y = jnp.dot(h.astype(matmul_dtype), w_out_ref[...],
                preferred_element_type=jnp.float32)
    y = y + b_out_ref[...]
    if out_act == "tanh":
        y = jnp.tanh(y)
    elif out_act is not None:
        raise ValueError(f"unknown out_activation: {out_act!r}")
    if scale != 1.0:
        y = y * scale
    o_ref[...] = y.astype(o_ref.dtype)


def prepare_ann_params(params, activation="silu", out_activation=None,
                       scale=1.0, matmul_dtype=jnp.bfloat16, pack=PACK):
    """One-time parameter prep (hoisted out of the per-call forward path).

    params: list of (W, b) with W shaped (fan_in, fan_out); first = input
    layer, last = output layer, middle = the (nLayers-1) hidden layers.
    """
    w_in, b_in = params[0]
    w_out, b_out = params[-1]
    hidden = params[1:-1]
    n_in, n_nodes = w_in.shape
    n_out = w_out.shape[1]
    n_hidden = len(hidden)
    P = pack

    bdiag = lambda w: jax.scipy.linalg.block_diag(*([w] * P))

    w_in_blk = bdiag(w_in).astype(matmul_dtype)                    # (P*in, P*H)
    b_in_blk = jnp.tile(b_in, P).reshape(1, P * n_nodes).astype(jnp.float32)
    if n_hidden:
        w_h_blk = jnp.stack([bdiag(w) for w, _ in hidden]).astype(matmul_dtype)
        b_h_blk = jnp.stack([jnp.tile(b, P) for _, b in hidden]
                            ).reshape(n_hidden, 1, P * n_nodes).astype(jnp.float32)
    else:  # dummy (unused) slice so the kernel signature stays uniform
        w_h_blk = jnp.zeros((1, P * n_nodes, P * n_nodes), matmul_dtype)
        b_h_blk = jnp.zeros((1, 1, P * n_nodes), jnp.float32)
    w_out_blk = bdiag(w_out).astype(matmul_dtype)                  # (P*H, P*out)
    b_out_blk = jnp.tile(b_out, P).reshape(1, P * n_out).astype(jnp.float32)

    return dict(
        w_in=w_in_blk, b_in=b_in_blk, w_h=w_h_blk, b_h=b_h_blk,
        w_out=w_out_blk, b_out=b_out_blk,
        n_in=n_in, n_nodes=n_nodes, n_out=n_out, n_hidden=n_hidden, pack=P,
        activation=activation, out_activation=out_activation,
        scale=float(scale), matmul_dtype=matmul_dtype)


def _choose_tiling(rows, packed_tile):
    """(rows_per_tile, n_tiles) for `rows` packed rows.

    n_tiles is even whenever > 1 so the 'parallel' grid axis splits evenly
    across v7x's two TensorCores; tiles are 16-sublane aligned (safe for bf16
    sublane packing).  Tiny batches use a single full block (no grid work).
    """
    if rows <= 16:
        return max(rows, 1), 1
    n_tiles = max(2, 2 * pl.cdiv(rows, 2 * packed_tile))   # smallest even count
    tm = pl.cdiv(pl.cdiv(rows, n_tiles), 16) * 16
    return tm, n_tiles


def ann_forward(prepped, x, batch_tile=1024):
    """Forward pass: x (M, n_in) -> (M, n_out), one fused pallas_call.

    batch_tile is in ORIGINAL batch rows (PACK rows ride one lane row).
    Sweep {512, 1024}: larger mostly adds vreg/VMEM pressure, not speed.
    """
    P = prepped["pack"]
    n_in, n_out = prepped["n_in"], prepped["n_out"]
    n_hidden = prepped["n_hidden"]
    out_dtype = x.dtype
    M = x.shape[0]
    assert x.shape[1] == n_in

    packed_tile = max(batch_tile // P, 16)
    rows = pl.cdiv(M, P)                                    # packed rows needed
    tm, n_tiles = _choose_tiling(rows, packed_tile)
    m_padded = n_tiles * tm * P
    if m_padded != M:
        # TODO(synk): mask the tail tile's store in-kernel instead of
        # pad + slice (saves two small HBM copies on ragged batches).
        x = jnp.pad(x, ((0, m_padded - M), (0, 0)))
    # Free, contiguous repack: PACK consecutive batch rows per lane row.
    xp = x.reshape(n_tiles * tm, P * n_in).astype(prepped["matmul_dtype"])

    kernel = functools.partial(
        _ann_fused_kernel,
        act=prepped["activation"], out_act=prepped["out_activation"],
        scale=prepped["scale"], n_hidden=n_hidden,
        matmul_dtype=prepped["matmul_dtype"])

    full2 = lambda i: (0, 0)
    full3 = lambda i: (0, 0, 0)

    yp = pl.pallas_call(
        kernel,
        out_shape=jax.ShapeDtypeStruct((n_tiles * tm, P * n_out), out_dtype),
        grid=(n_tiles,),
        in_specs=[
            pl.BlockSpec((tm, P * n_in), lambda i: (i, 0)),   # batch-tiled input
            pl.BlockSpec(prepped["w_in"].shape, full2),       # weights: resident
            pl.BlockSpec(prepped["b_in"].shape, full2),
            pl.BlockSpec(prepped["w_h"].shape, full3),        # stacked hidden W
            pl.BlockSpec(prepped["b_h"].shape, full3),        # stacked hidden b
            pl.BlockSpec(prepped["w_out"].shape, full2),
            pl.BlockSpec(prepped["b_out"].shape, full2),
        ],
        out_specs=pl.BlockSpec((tm, P * n_out), lambda i: (i, 0)),
        compiler_params=pltpu.CompilerParams(
            dimension_semantics=("parallel",)),               # v7x megacore
    )(xp, prepped["w_in"], prepped["b_in"], prepped["w_h"], prepped["b_h"],
      prepped["w_out"], prepped["b_out"])

    y = yp.reshape(m_padded, n_out)
    return y if m_padded == M else y[:M]


def init_ann_params(key, n_in, n_out, n_nodes, n_layers, dtype=jnp.float32):
    """Init mimicking PyTorch Linear default U(-1/sqrt(fan_in), +1/sqrt(fan_in))."""
    params = []
    dims = [n_in] + [n_nodes] * n_layers + [n_out]
    for i in range(n_layers + 1):
        fan_in, fan_out = dims[i], dims[i + 1]
        key, kw, kb = jax.random.split(key, 3)
        bound = 1.0 / jnp.sqrt(fan_in)
        w = jax.random.uniform(kw, (fan_in, fan_out), dtype, -bound, bound)
        b = jax.random.uniform(kb, (fan_out,), dtype, -bound, bound)
        params.append((w, b))
    return params


def _reference(params, x, activation, out_activation, scale):
    h = x
    for (w, b) in params[:-1]:
        z = jnp.dot(h, w, precision=jax.lax.Precision.HIGHEST) + b
        if activation == "silu":
            h = z * jax.nn.sigmoid(z)
        elif activation == "relu":
            h = jnp.maximum(z, 0.0)
        elif activation == "sigmoid":
            h = jax.nn.sigmoid(z)
        else:
            h = z
    y = jnp.dot(h, params[-1][0], precision=jax.lax.Precision.HIGHEST) + params[-1][1]
    if out_activation == "tanh":
        y = jnp.tanh(y)
    return scale * y


if __name__ == "__main__":
    # Shapes consistent with the module: n_in=16, nNodes=32, nLayers=3, n_out=8.
    n_in, n_out, n_nodes, n_layers = 16, 8, 32, 3
    key = jax.random.PRNGKey(0)
    key, kx, kx2 = jax.random.split(key, 3)
    params = init_ann_params(key, n_in, n_out, n_nodes, n_layers)

    # One-time parameter prep (hoisted out of the forward path).
    prep_f32 = prepare_ann_params(params, activation="silu", out_activation="tanh",
                                  scale=2.0, matmul_dtype=jnp.float32)
    prep_bf16 = prepare_ann_params(params, activation="silu", out_activation="tanh",
                                   scale=2.0, matmul_dtype=jnp.bfloat16)

    # --- small batch: single fused block, no grid ---
    x = jax.random.normal(kx, (8, n_in), jnp.float32)
    y_ref = _reference(params, x, "silu", "tanh", 2.0)

    y32 = jax.block_until_ready(ann_forward(prep_f32, x))
    assert y32.shape == (8, n_out)
    assert jnp.allclose(y32, y_ref, atol=1e-4, rtol=1e-4), "f32 mismatch (small)"

    y16 = jax.block_until_ready(ann_forward(prep_bf16, x))
    assert y16.shape == (8, n_out)
    assert jnp.allclose(y16, y_ref, atol=5e-2, rtol=5e-2), "bf16 mismatch (small)"

    # --- larger ragged batch: exercises the gridded / megacore-parallel path ---
    xb = jax.random.normal(kx2, (1030, n_in), jnp.float32)
    yb_ref = _reference(params, xb, "silu", "tanh", 2.0)

    yb32 = jax.block_until_ready(ann_forward(prep_f32, xb, batch_tile=1024))
    assert yb32.shape == (1030, n_out)
    assert jnp.allclose(yb32, yb_ref, atol=1e-4, rtol=1e-4), "f32 mismatch (big)"

    yb16 = jax.block_until_ready(ann_forward(prep_bf16, xb, batch_tile=1024))
    assert yb16.shape == (1030, n_out)
    assert jnp.allclose(yb16, yb_ref, atol=5e-2, rtol=5e-2), "bf16 mismatch (big)"

    print("KERNEL_OK")
</pallas_src>

<mosaic_0001>
module attributes {stable_mosaic.version = 11 : i64} {
  func.func @_ann_fused_kernel(%arg0: i32, %arg1: memref<2x64xf32, #tpu.memory_space<vmem>>, %arg2: memref<64x128xf32, #tpu.memory_space<vmem>>, %arg3: memref<1x128xf32, #tpu.memory_space<vmem>>, %arg4: memref<2x128x128xf32, #tpu.memory_space<vmem>>, %arg5: memref<2x1x128xf32, #tpu.memory_space<vmem>>, %arg6: memref<128x32xf32, #tpu.memory_space<vmem>>, %arg7: memref<1x32xf32, #tpu.memory_space<vmem>>, %arg8: memref<2x32xf32, #tpu.memory_space<vmem>>) attributes {dimension_semantics = [#tpu.dimension_semantics<parallel>], iteration_bounds = array<i64: 1>, scalar_prefetch = 0 : i64, scratch_operands = 0 : i64, tpu.core_type = #tpu.core_type<tc>, window_params = [{transform_indices = @transform_0, window_bounds = array<i64: 2, 64>}, {pipeline_mode = #tpu.pipeline_mode<synchronous>, transform_indices = @transform_1, window_bounds = array<i64: 64, 128>}, {pipeline_mode = #tpu.pipeline_mode<synchronous>, transform_indices = @transform_2, window_bounds = array<i64: 1, 128>}, {pipeline_mode = #tpu.pipeline_mode<synchronous>, transform_indices = @transform_3, window_bounds = array<i64: 2, 128, 128>}, {pipeline_mode = #tpu.pipeline_mode<synchronous>, transform_indices = @transform_4, window_bounds = array<i64: 2, 1, 128>}, {pipeline_mode = #tpu.pipeline_mode<synchronous>, transform_indices = @transform_5, window_bounds = array<i64: 128, 32>}, {pipeline_mode = #tpu.pipeline_mode<synchronous>, transform_indices = @transform_6, window_bounds = array<i64: 1, 32>}, {transform_indices = @transform_7, window_bounds = array<i64: 2, 32>}]} {
    %c0 = arith.constant 0 : index
    %c0_0 = arith.constant 0 : index
    %0 = vector.load %arg1[%c0, %c0_0] : memref<2x64xf32, #tpu.memory_space<vmem>>, vector<2x64xf32>
    %c0_1 = arith.constant 0 : index
    %c0_2 = arith.constant 0 : index
    %1 = vector.load %arg2[%c0_1, %c0_2] : memref<64x128xf32, #tpu.memory_space<vmem>>, vector<64x128xf32>
    %cst = arith.constant dense<0.000000e+00> : vector<2x128xf32>
    %2 = tpu.matmul %0, %1, %cst {dimension_numbers = #tpu.dot_dimension_numbers<[1], [0], [0], [1], [0, 0, 1, 1], [], []>} : vector<2x64xf32>, vector<64x128xf32>, vector<2x128xf32> -> vector<2x128xf32>
    %c0_3 = arith.constant 0 : index
    %c0_4 = arith.constant 0 : index
    %3 = vector.load %arg3[%c0_3, %c0_4] : memref<1x128xf32, #tpu.memory_space<vmem>>, vector<1x128xf32>
    %4 = vector.broadcast %3 : vector<1x128xf32> to vector<2x128xf32>
    %5 = arith.addf %2, %4 : vector<2x128xf32>
    %6 = arith.negf %5 : vector<2x128xf32>
    %7 = math.exp %6 : vector<2x128xf32>
    %cst_5 = arith.constant 1.000000e+00 : f32
    %8 = vector.broadcast %cst_5 : f32 to vector<2x128xf32>
    %9 = arith.addf %8, %7 : vector<2x128xf32>
    %10 = arith.divf %8, %9 : vector<2x128xf32>
    %11 = arith.mulf %5, %10 : vector<2x128xf32>
    %c0_6 = arith.constant 0 : index
    %c0_7 = arith.constant 0 : index
    %c0_8 = arith.constant 0 : index
    %12 = vector.load %arg4[%c0_6, %c0_7, %c0_8] : memref<2x128x128xf32, #tpu.memory_space<vmem>>, vector<1x128x128xf32>
    %13 = vector.shape_cast %12 : vector<1x128x128xf32> to vector<128x128xf32>
    %cst_9 = arith.constant dense<0.000000e+00> : vector<2x128xf32>
    %14 = tpu.matmul %11, %13, %cst_9 {dimension_numbers = #tpu.dot_dimension_numbers<[1], [0], [0], [1], [0, 0, 1, 1], [], []>} : vector<2x128xf32>, vector<128x128xf32>, vector<2x128xf32> -> vector<2x128xf32>
    %c0_10 = arith.constant 0 : index
    %c0_11 = arith.constant 0 : index
    %c0_12 = arith.constant 0 : index
    %15 = vector.load %arg5[%c0_10, %c0_11, %c0_12] : memref<2x1x128xf32, #tpu.memory_space<vmem>>, vector<1x1x128xf32>
    %16 = vector.shape_cast %15 : vector<1x1x128xf32> to vector<1x128xf32>
    %17 = vector.broadcast %16 : vector<1x128xf32> to vector<2x128xf32>
    %18 = arith.addf %14, %17 : vector<2x128xf32>
    %19 = arith.negf %18 : vector<2x128xf32>
    %20 = math.exp %19 : vector<2x128xf32>
    %cst_13 = arith.constant 1.000000e+00 : f32
    %21 = vector.broadcast %cst_13 : f32 to vector<2x128xf32>
    %22 = arith.addf %21, %20 : vector<2x128xf32>
    %23 = arith.divf %21, %22 : vector<2x128xf32>
    %24 = arith.mulf %18, %23 : vector<2x128xf32>
    %c1 = arith.constant 1 : index
    %c0_14 = arith.constant 0 : index
    %c0_15 = arith.constant 0 : index
    %25 = vector.load %arg4[%c1, %c0_14, %c0_15] : memref<2x128x128xf32, #tpu.memory_space<vmem>>, vector<1x128x128xf32>
    %26 = vector.shape_cast %25 : vector<1x128x128xf32> to vector<128x128xf32>
    %cst_16 = arith.constant dense<0.000000e+00> : vector<2x128xf32>
    %27 = tpu.matmul %24, %26, %cst_16 {dimension_numbers = #tpu.dot_dimension_numbers<[1], [0], [0], [1], [0, 0, 1, 1], [], []>} : vector<2x128xf32>, vector<128x128xf32>, vector<2x128xf32> -> vector<2x128xf32>
    %c1_17 = arith.constant 1 : index
    %c0_18 = arith.constant 0 : index
    %c0_19 = arith.constant 0 : index
    %28 = vector.load %arg5[%c1_17, %c0_18, %c0_19] : memref<2x1x128xf32, #tpu.memory_space<vmem>>, vector<1x1x128xf32>
    %29 = vector.shape_cast %28 : vector<1x1x128xf32> to vector<1x128xf32>
    %30 = vector.broadcast %29 : vector<1x128xf32> to vector<2x128xf32>
    %31 = arith.addf %27, %30 : vector<2x128xf32>
    %32 = arith.negf %31 : vector<2x128xf32>
    %33 = math.exp %32 : vector<2x128xf32>
    %cst_20 = arith.constant 1.000000e+00 : f32
    %34 = vector.broadcast %cst_20 : f32 to vector<2x128xf32>
    %35 = arith.addf %34, %33 : vector<2x128xf32>
    %36 = arith.divf %34, %35 : vector<2x128xf32>
    %37 = arith.mulf %31, %36 : vector<2x128xf32>
    %c0_21 = arith.constant 0 : index
    %c0_22 = arith.constant 0 : index
    %38 = vector.load %arg6[%c0_21, %c0_22] : memref<128x32xf32, #tpu.memory_space<vmem>>, vector<128x32xf32>
    %cst_23 = arith.constant dense<0.000000e+00> : vector<2x32xf32>
    %39 = tpu.matmul %37, %38, %cst_23 {dimension_numbers = #tpu.dot_dimension_numbers<[1], [0], [0], [1], [0, 0, 1, 1], [], []>} : vector<2x128xf32>, vector<128x32xf32>, vector<2x32xf32> -> vector<2x32xf32>
    %c0_24 = arith.constant 0 : index
    %c0_25 = arith.constant 0 : index
    %40 = vector.load %arg7[%c0_24, %c0_25] : memref<1x32xf32, #tpu.memory_space<vmem>>, vector<1x32xf32>
    %41 = vector.broadcast %40 : vector<1x32xf32> to vector<2x32xf32>
    %42 = arith.addf %39, %41 : vector<2x32xf32>
    %43 = math.tanh %42 : vector<2x32xf32>
    %cst_26 = arith.constant 2.000000e+00 : f32
    %44 = vector.broadcast %cst_26 : f32 to vector<2x32xf32>
    %45 = arith.mulf %43, %44 : vector<2x32xf32>
    %c0_27 = arith.constant 0 : index
    %c0_28 = arith.constant 0 : index
    %46 = vector.load %arg8[%c0_27, %c0_28] : memref<2x32xf32, #tpu.memory_space<vmem>>, vector<2x32xf32>
    tpu.vector_store %arg8[%c0_27, %c0_28], %45 {strides = array<i32>} : memref<2x32xf32, #tpu.memory_space<vmem>>, vector<2x32xf32>,
    return
  }
  func.func @transform_0(%arg0: i32) -> (i32, i32) {
    %c0_i32 = arith.constant 0 : i32
    %c0_i32_0 = arith.constant 0 : i32
    return %arg0, %c0_i32 : i32, i32
  }
  func.func @transform_1(%arg0: i32) -> (i32, i32) {
    %c0_i32 = arith.constant 0 : i32
    %c0_i32_0 = arith.constant 0 : i32
    %c0_i32_1 = arith.constant 0 : i32
    return %c0_i32, %c0_i32_0 : i32, i32
  }
  func.func @transform_2(%arg0: i32) -> (i32, i32) {
    %c0_i32 = arith.constant 0 : i32
    %c0_i32_0 = arith.constant 0 : i32
    %c0_i32_1 = arith.constant 0 : i32
    return %c0_i32, %c0_i32_0 : i32, i32
  }
  func.func @transform_3(%arg0: i32) -> (i32, i32, i32) {
    %c0_i32 = arith.constant 0 : i32
    %c0_i32_0 = arith.constant 0 : i32
    %c0_i32_1 = arith.constant 0 : i32
    %c0_i32_2 = arith.constant 0 : i32
    return %c0_i32, %c0_i32_0, %c0_i32_1 : i32, i32, i32
  }
  func.func @transform_4(%arg0: i32) -> (i32, i32, i32) {
    %c0_i32 = arith.constant 0 : i32
    %c0_i32_0 = arith.constant 0 : i32
    %c0_i32_1 = arith.constant 0 : i32
    %c0_i32_2 = arith.constant 0 : i32
    return %c0_i32, %c0_i32_0, %c0_i32_1 : i32, i32, i32
  }
  func.func @transform_5(%arg0: i32) -> (i32, i32) {
    %c0_i32 = arith.constant 0 : i32
    %c0_i32_0 = arith.constant 0 : i32
    %c0_i32_1 = arith.constant 0 : i32
    return %c0_i32, %c0_i32_0 : i32, i32
  }
  func.func @transform_6(%arg0: i32) -> (i32, i32) {
    %c0_i32 = arith.constant 0 : i32
    %c0_i32_0 = arith.constant 0 : i32
    %c0_i32_1 = arith.constant 0 : i32
    return %c0_i32, %c0_i32_0 : i32, i32
  }
  func.func @transform_7(%arg0: i32) -> (i32, i32) {
    %c0_i32 = arith.constant 0 : i32
    %c0_i32_0 = arith.constant 0 : i32
    return %arg0, %c0_i32 : i32, i32
  }
}

</mosaic_0001>

<llo_original>
// kernel: tpu_custom_call.1
$region0: #{tpu_custom_call.1}
  #allocation0 [shape = 'u32[]', space=smem, size = 0x4, offset = 0x4, fixed_abs, tag = 'smem constant byte address 0x4 - core index']
  #allocation1 [shape = 'u32[144,128]{1,0:T(1,128)}', space=vmem, size = 0x12000, scoped, tag = 'internal scratch']
  %s0 = inlined_call_operand.vmem [shape: f32[2,64], index: 0, kind: input, shape index: {}]
  %s1 = inlined_call_operand.vmem [shape: f32[64,128], index: 1, kind: input, shape index: {}]
  %s2 = inlined_call_operand.vmem [shape: f32[1,128], index: 2, kind: input, shape index: {}]
  %s3 = inlined_call_operand.hbm [shape: f32[2,128,128], index: 3, kind: input, shape index: {}]
  %s4 = inlined_call_operand.vmem [shape: f32[2,1,128], index: 4, kind: input, shape index: {}]
  %s5 = inlined_call_operand.vmem [shape: f32[128,32], index: 5, kind: input, shape index: {}]
  %s6 = inlined_call_operand.vmem [shape: f32[1,32], index: 6, kind: input, shape index: {}]
  %s7 = inlined_call_operand.hbm [shape: f32[2,32], index: 7, kind: output, shape index: {}]
  %s8 = sld [smem:[#allocation0]]
  $region42: #{tpu_custom_call.1} parent=0
    _
  %s10 = ssub.s32 1, %s8
  %s11 = scalar_select 0, %s10, %s8
  $region1: #{tpu_custom_call.1} parent=0
    #allocation2 [shape = 'u8[131072]{0}', space=vmem, size = 0x20000, scoped, tag = 'input window, operand 3, single buffered']
    #allocation3 [shape = 's32[1]{0}', space=sflag, size = 0x4, scoped, tag = 'scoped memory for tpu_custom_call.1']
    #allocation4 [shape = 's32[1]{0}', space=sflag, size = 0x4, scoped, tag = 'scoped memory for tpu_custom_call.1']
    #allocation5 [shape = 'u8[1024]{0}', space=vmem, size = 0x400, scoped, tag = 'output window, operand 0, single buffered']
    %12 = vsyncpa [#allocation3], 0
    %13 = vsyncpa [#allocation4], 0
    // Predicated region
    $region2: #{tpu_custom_call.1} parent=1 // pred_check
      _
    $region3: #{tpu_custom_call.1} parent=1 // pred_check_branch
      %15 = sbr.rel (0) target = $region5
    $region4: #{tpu_custom_call.1} parent=1 // pred_region
      _
    $region5: #{tpu_custom_call.1} parent=1 // pred_fallthru
      _
    // Predicated region
    $region6: #{tpu_custom_call.1} parent=1 // pred_check
      _
    $region7: #{tpu_custom_call.1} parent=1 // pred_check_branch
      %17 = sbr.rel (0) target = $region9
    $region8: #{tpu_custom_call.1} parent=1 // pred_region
      _
    $region9: #{tpu_custom_call.1} parent=1 // pred_fallthru
      _
    // Predicated region
    $region10: #{tpu_custom_call.1} parent=1 // pred_check
      _
    $region11: #{tpu_custom_call.1} parent=1 // pred_check_branch
      %19 = sbr.rel (0) target = $region13
    $region12: #{tpu_custom_call.1} parent=1 // pred_region
      _
    $region13: #{tpu_custom_call.1} parent=1 // pred_fallthru
      _
    // Predicated region
    $region14: #{tpu_custom_call.1} parent=1 // pred_check
      _
    $region15: #{tpu_custom_call.1} parent=1 // pred_check_branch
      %21 = sbr.rel (0) target = $region17
    $region16: #{tpu_custom_call.1} parent=1 // pred_region
      %s23 = ssub.s32 4096, 4096
      %24 = vsyncadd [#allocation3], %s23
      %s25 = sshll.u32 [#allocation2], 4
      %s26 = int_to_ptr.vmem [resolvable:$true] %s25
      %31 = dma.hbm_to_vmem [thread:$0]  %s3, 4096, %s26, [#allocation3], 128, 128, 8
    $region17: #{tpu_custom_call.1} parent=1 // pred_fallthru
      _
    // Predicated region
    $region18: #{tpu_custom_call.1} parent=1 // pred_check
      _
    $region19: #{tpu_custom_call.1} parent=1 // pred_check_branch
      %33 = sbr.rel (0) target = $region21
    $region20: #{tpu_custom_call.1} parent=1 // pred_region
      _
    $region21: #{tpu_custom_call.1} parent=1 // pred_fallthru
      _
    // Predicated region
    $region22: #{tpu_custom_call.1} parent=1 // pred_check
      _
    $region23: #{tpu_custom_call.1} parent=1 // pred_check_branch
      %35 = sbr.rel (0) target = $region25
    $region24: #{tpu_custom_call.1} parent=1 // pred_region
      _
    $region25: #{tpu_custom_call.1} parent=1 // pred_fallthru
      _
    // Predicated region
    $region26: #{tpu_custom_call.1} parent=1 // pred_check
      _
    $region27: #{tpu_custom_call.1} parent=1 // pred_check_branch
      %37 = sbr.rel (0) target = $region29
    $region28: #{tpu_custom_call.1} parent=1 // pred_region
      _
    $region29: #{tpu_custom_call.1} parent=1 // pred_fallthru
      _
    // Predicated region
    $region30: #{tpu_custom_call.1} parent=1 // pred_check
      _
    $region31: #{tpu_custom_call.1} parent=1 // pred_check_branch
      %39 = sbr.rel (0) target = $region33
    $region32: #{tpu_custom_call.1} parent=1 // pred_region
      %40 = dma.done [#allocation3], 4096
    $region33: #{tpu_custom_call.1} parent=1 // pred_fallthru
      _
    %v41 = vld [vmem:[%s0] sm:$0x3]
    %v42 = vld [vmem:[%s1] sm:$0xff]
    %v43 = vld [vmem:[%s1 + $0x8] sm:$0xff]
    %v44 = vld [vmem:[%s1 + $0x10] sm:$0xff]
    %v45 = vld [vmem:[%s1 + $0x18] sm:$0xff]
    %v46 = vld [vmem:[%s1 + $0x20] sm:$0xff]
    %v47 = vld [vmem:[%s1 + $0x28] sm:$0xff]
    %v48 = vld [vmem:[%s1 + $0x30] sm:$0xff]
    %v49 = vld [vmem:[%s1 + $0x38] sm:$0xff]
    %v50 = vld [vmem:[%s2] sm:$0x1]
    %v52 = vlaneseq
    %v53 = vshrl.u32 %v52, 7
    %v54 = vsub.s32 0, %v53
    %v55 = vrot.slane %v50, %v54
    %vm57 = vcmask 523264
    %v59 = vsel %vm57, %v41, 0
    %61 = vmatprep.subr.mxu0 0.0
    %62 = vmatpush1.msra.mxu0 %v42
    %63 = vmatprep.subr.mxu0 0.0
    %64 = vmatpush1.msra.mxu0 %v43
    %65 = vmatprep.subr.mxu0 0.0
    %66 = vmatpush1.msra.mxu0 %v44
    %67 = vmatprep.subr.mxu0 0.0
    %68 = vmatpush1.msra.mxu0 %v45
    %69 = vmatprep.subr.mxu0 0.0
    %70 = vmatpush1.msra.mxu0 %v46
    %71 = vmatprep.subr.mxu0 0.0
    %72 = vmatpush1.msra.mxu0 %v47
    %73 = vmatprep.subr.mxu0 0.0
    %74 = vmatpush1.msra.mxu0 %v48
    %75 = vmatprep.subr.mxu0 0.0
    %76 = vmatpush1.msra.mxu0 %v49
    %77 = vmatprep.subr.mxu0 0.0
    %78 = vmatpush1.msra.mxu0 0.0
    %79 = vmatprep.subr.mxu0 0.0
    %80 = vmatpush1.msra.mxu0 0.0
    %81 = vmatprep.subr.mxu0 0.0
    %82 = vmatpush1.msra.mxu0 0.0
    %83 = vmatprep.subr.mxu0 0.0
    %84 = vmatpush1.msra.mxu0 0.0
    %85 = vmatprep.subr.mxu0 0.0
    %86 = vmatpush1.msra.mxu0 0.0
    %87 = vmatprep.subr.mxu0 0.0
    %88 = vmatpush1.msra.mxu0 0.0
    %89 = vmatprep.subr.mxu0 0.0
    %90 = vmatpush1.msra.mxu0 0.0
    %91 = vmatprep.subr.mxu0 0.0
    %92 = vmatpush1.msra.mxu0 0.0
    %93 = vmatprep.subr.mxu0 0.0
    %94 = vmatpush1.msra.mxu0 0.0
    %95 = vmatprep.subr.mxu0 0.0
    %96 = vmatpush1.msra.mxu0 0.0
    %97 = vmatprep.subr.mxu0 0.0
    %98 = vmatpush1.msra.mxu0 0.0
    %99 = vmatprep.subr.mxu0 0.0
    %100 = vmatpush1.msra.mxu0 0.0
    %101 = vmatprep.subr.mxu0 0.0
    %102 = vmatpush1.msra.mxu0 0.0
    %103 = vmatprep.subr.mxu0 0.0
    %104 = vmatpush1.msra.mxu0 0.0
    %105 = vmatprep.subr.mxu0 0.0
    %106 = vmatpush1.msra.mxu0 0.0
    %107 = vmatprep.subr.mxu0 0.0
    %108 = vmatpush1.msra.mxu0 0.0
    %109 = vmatprep.subr.mxu0 0.0
    %110 = vmatpush1.msra.mxu0 0.0
    %111 = vmatprep.subr.mxu0 0.0
    %112 = vmatpush1.msra.mxu0 0.0
    %113 = vmatprep.subr.mxu0 0.0
    %114 = vmatpush1.msra.mxu0 0.0
    %115 = vmatprep.subr.mxu0 0.0
    %116 = vmatpush1.msra.mxu0 0.0
    %117 = vmatprep.subr.mxu0 0.0
    %118 = vmatpush1.msra.mxu0 0.0
    %119 = vmatprep.subr.mxu0 0.0
    %120 = vmatpush1.msra.mxu0 0.0
    %121 = vmatprep.subr.mxu0 0.0
    %122 = vmatpush1.msra.mxu0 0.0
    %123 = vmatprep.subr.mxu0 0.0
    %124 = vmatpush1.msra.mxu0 0.0
    %125 = vmatprep.mubr.f32.mxu0 0.0
    %126 = vmatmul.mubr.f32.gmra.mrb[0].mxu0 %v59
    %v127 = vpop.f32.mrb[0].mxu0
    %v128 = vadd.f32 %v55, %v127
    %v129 = vpop.f32.mrb[0].mxu0
    %130 = vdwg.mxu0
    %v131 = vxor.u32 %v128, 2147483648
    %v132 = vmul.f32 %v131, 1.442695
    %v133 = vpow.pop %v132
    %v134 = vadd.f32 %v133, 1.0
    %v135 = vrcp.pop %v134
    %v136 = vmul.f32 1.0, %v135
    %v137 = vmul.f32 %v128, %v136
    %v138 = vld [vmem:[#allocation2] sm:$0xff]
    %v139 = vld [vmem:[#allocation2 + $0x8] sm:$0xff]
    %v140 = vld [vmem:[#allocation2 + $0x10] sm:$0xff]
    %v141 = vld [vmem:[#allocation2 + $0x18] sm:$0xff]
    %v142 = vld [vmem:[#allocation2 + $0x20] sm:$0xff]
    %v143 = vld [vmem:[#allocation2 + $0x28] sm:$0xff]
    %v144 = vld [vmem:[#allocation2 + $0x30] sm:$0xff]
    %v145 = vld [vmem:[#allocation2 + $0x38] sm:$0xff]
    %v146 = vld [vmem:[#allocation2 + $0x40] sm:$0xff]
    %v147 = vld [vmem:[#allocation2 + $0x48] sm:$0xff]
    %v148 = vld [vmem:[#allocation2 + $0x50] sm:$0xff]
    %v149 = vld [vmem:[#allocation2 + $0x58] sm:$0xff]
    %v150 = vld [vmem:[#allocation2 + $0x60] sm:$0xff]
    %v151 = vld [vmem:[#allocation2 + $0x68] sm:$0xff]
    %v152 = vld [vmem:[#allocation2 + $0x70] sm:$0xff]
    %v153 = vld [vmem:[#allocation2 + $0x78] sm:$0xff]
    %v154 = vld [vmem:[%s4] sm:$0x1]
    %v156 = vlaneseq
    %v157 = vshrl.u32 %v156, 7
    %v158 = vsub.s32 0, %v157
    %v159 = vrot.slane %v154, %v158
    %161 = vmatprep.subr.mxu0 0.0
    %162 = vmatpush1.msra.mxu0 %v138
    %163 = vmatprep.subr.mxu0 0.0
    %164 = vmatpush1.msra.mxu0 %v139
    %165 = vmatprep.subr.mxu0 0.0
    %166 = vmatpush1.msra.mxu0 %v140
    %167 = vmatprep.subr.mxu0 0.0
    %168 = vmatpush1.msra.mxu0 %v141
    %169 = vmatprep.subr.mxu0 0.0
    %170 = vmatpush1.msra.mxu0 %v142
    %171 = vmatprep.subr.mxu0 0.0
    %172 = vmatpush1.msra.mxu0 %v143
    %173 = vmatprep.subr.mxu0 0.0
    %174 = vmatpush1.msra.mxu0 %v144
    %175 = vmatprep.subr.mxu0 0.0
    %176 = vmatpush1.msra.mxu0 %v145
    %177 = vmatprep.subr.mxu0 0.0
    %178 = vmatpush1.msra.mxu0 %v146
    %179 = vmatprep.subr.mxu0 0.0
    %180 = vmatpush1.msra.mxu0 %v147
    %181 = vmatprep.subr.mxu0 0.0
    %182 = vmatpush1.msra.mxu0 %v148
    %183 = vmatprep.subr.mxu0 0.0
    %184 = vmatpush1.msra.mxu0 %v149
    %185 = vmatprep.subr.mxu0 0.0
    %186 = vmatpush1.msra.mxu0 %v150
    %187 = vmatprep.subr.mxu0 0.0
    %188 = vmatpush1.msra.mxu0 %v151
    %189 = vmatprep.subr.mxu0 0.0
    %190 = vmatpush1.msra.mxu0 %v152
    %191 = vmatprep.subr.mxu0 0.0
    %192 = vmatpush1.msra.mxu0 %v153
    %193 = vmatprep.subr.mxu0 0.0
    %194 = vmatpush1.msra.mxu0 0.0
    %195 = vmatprep.subr.mxu0 0.0
    %196 = vmatpush1.msra.mxu0 0.0
    %197 = vmatprep.subr.mxu0 0.0
    %198 = vmatpush1.msra.mxu0 0.0
    %199 = vmatprep.subr.mxu0 0.0
    %200 = vmatpush1.msra.mxu0 0.0
    %201 = vmatprep.subr.mxu0 0.0
    %202 = vmatpush1.msra.mxu0 0.0
    %203 = vmatprep.subr.mxu0 0.0
    %204 = vmatpush1.msra.mxu0 0.0
    %205 = vmatprep.subr.mxu0 0.0
    %206 = vmatpush1.msra.mxu0 0.0
    %207 = vmatprep.subr.mxu0 0.0
    %208 = vmatpush1.msra.mxu0 0.0
    %209 = vmatprep.subr.mxu0 0.0
    %210 = vmatpush1.msra.mxu0 0.0
    %211 = vmatprep.subr.mxu0 0.0
    %212 = vmatpush1.msra.mxu0 0.0
    %213 = vmatprep.subr.mxu0 0.0
    %214 = vmatpush1.msra.mxu0 0.0
    %215 = vmatprep.subr.mxu0 0.0
    %216 = vmatpush1.msra.mxu0 0.0
    %217 = vmatprep.subr.mxu0 0.0
    %218 = vmatpush1.msra.mxu0 0.0
    %219 = vmatprep.subr.mxu0 0.0
    %220 = vmatpush1.msra.mxu0 0.0
    %221 = vmatprep.subr.mxu0 0.0
    %222 = vmatpush1.msra.mxu0 0.0
    %223 = vmatprep.subr.mxu0 0.0
    %224 = vmatpush1.msra.mxu0 0.0
    %225 = vmatprep.mubr.f32.mxu0 0.0
    %226 = vmatmul.mubr.f32.gmra.mrb[0].mxu0 %v137
    %v227 = vpop.f32.mrb[0].mxu0
    %v228 = vadd.f32 %v159, %v227
    %v229 = vpop.f32.mrb[0].mxu0
    %230 = vdwg.mxu0
    %v231 = vxor.u32 %v228, 2147483648
    %v232 = vmul.f32 %v231, 1.442695
    %v233 = vpow.pop %v232
    %v234 = vadd.f32 %v233, 1.0
    %v235 = vrcp.pop %v234
    %v236 = vmul.f32 1.0, %v235
    %v237 = vmul.f32 %v228, %v236
    %s238 = scalar_lea.vmem [#allocation2], 128
    %v239 = vld [vmem:[%s238] sm:$0xff]
    %v240 = vld [vmem:[%s238 + $0x8] sm:$0xff]
    %v241 = vld [vmem:[%s238 + $0x10] sm:$0xff]
    %v242 = vld [vmem:[%s238 + $0x18] sm:$0xff]
    %v243 = vld [vmem:[%s238 + $0x20] sm:$0xff]
    %v244 = vld [vmem:[%s238 + $0x28] sm:$0xff]
    %v245 = vld [vmem:[%s238 + $0x30] sm:$0xff]
    %v246 = vld [vmem:[%s238 + $0x38] sm:$0xff]
    %v247 = vld [vmem:[%s238 + $0x40] sm:$0xff]
    %v248 = vld [vmem:[%s238 + $0x48] sm:$0xff]
    %v249 = vld [vmem:[%s238 + $0x50] sm:$0xff]
    %v250 = vld [vmem:[%s238 + $0x58] sm:$0xff]
    %v251 = vld [vmem:[%s238 + $0x60] sm:$0xff]
    %v252 = vld [vmem:[%s238 + $0x68] sm:$0xff]
    %v253 = vld [vmem:[%s238 + $0x70] sm:$0xff]
    %v254 = vld [vmem:[%s238 + $0x78] sm:$0xff]
    %s255 = scalar_lea.vmem %s4, 1
    %v256 = vld [vmem:[%s255] sm:$0x1]
    %v258 = vlaneseq
    %v259 = vshrl.u32 %v258, 7
    %v260 = vsub.s32 0, %v259
    %v261 = vrot.slane %v256, %v260
    %263 = vmatprep.subr.mxu0 0.0
    %264 = vmatpush1.msra.mxu0 %v239
    %265 = vmatprep.subr.mxu0 0.0
    %266 = vmatpush1.msra.mxu0 %v240
    %267 = vmatprep.subr.mxu0 0.0
    %268 = vmatpush1.msra.mxu0 %v241
    %269 = vmatprep.subr.mxu0 0.0
    %270 = vmatpush1.msra.mxu0 %v242
    %271 = vmatprep.subr.mxu0 0.0
    %272 = vmatpush1.msra.mxu0 %v243
    %273 = vmatprep.subr.mxu0 0.0
    %274 = vmatpush1.msra.mxu0 %v244
    %275 = vmatprep.subr.mxu0 0.0
    %276 = vmatpush1.msra.mxu0 %v245
    %277 = vmatprep.subr.mxu0 0.0
    %278 = vmatpush1.msra.mxu0 %v246
    %279 = vmatprep.subr.mxu0 0.0
    %280 = vmatpush1.msra.mxu0 %v247
    %281 = vmatprep.subr.mxu0 0.0
    %282 = vmatpush1.msra.mxu0 %v248
    %283 = vmatprep.subr.mxu0 0.0
    %284 = vmatpush1.msra.mxu0 %v249
    %285 = vmatprep.subr.mxu0 0.0
    %286 = vmatpush1.msra.mxu0 %v250
    %287 = vmatprep.subr.mxu0 0.0
    %288 = vmatpush1.msra.mxu0 %v251
    %289 = vmatprep.subr.mxu0 0.0
    %290 = vmatpush1.msra.mxu0 %v252
    %291 = vmatprep.subr.mxu0 0.0
    %292 = vmatpush1.msra.mxu0 %v253
    %293 = vmatprep.subr.mxu0 0.0
    %294 = vmatpush1.msra.mxu0 %v254
    %295 = vmatprep.subr.mxu0 0.0
    %296 = vmatpush1.msra.mxu0 0.0
    %297 = vmatprep.subr.mxu0 0.0
    %298 = vmatpush1.msra.mxu0 0.0
    %299 = vmatprep.subr.mxu0 0.0
    %300 = vmatpush1.msra.mxu0 0.0
    %301 = vmatprep.subr.mxu0 0.0
    %302 = vmatpush1.msra.mxu0 0.0
    %303 = vmatprep.subr.mxu0 0.0
    %304 = vmatpush1.msra.mxu0 0.0
    %305 = vmatprep.subr.mxu0 0.0
    %306 = vmatpush1.msra.mxu0 0.0
    %307 = vmatprep.subr.mxu0 0.0
    %308 = vmatpush1.msra.mxu0 0.0
    %309 = vmatprep.subr.mxu0 0.0
    %310 = vmatpush1.msra.mxu0 0.0
    %311 = vmatprep.subr.mxu0 0.0
    %312 = vmatpush1.msra.mxu0 0.0
    %313 = vmatprep.subr.mxu0 0.0
    %314 = vmatpush1.msra.mxu0 0.0
    %315 = vmatprep.subr.mxu0 0.0
    %316 = vmatpush1.msra.mxu0 0.0
    %317 = vmatprep.subr.mxu0 0.0
    %318 = vmatpush1.msra.mxu0 0.0
    %319 = vmatprep.subr.mxu0 0.0
    %320 = vmatpush1.msra.mxu0 0.0
    %321 = vmatprep.subr.mxu0 0.0
    %322 = vmatpush1.msra.mxu0 0.0
    %323 = vmatprep.subr.mxu0 0.0
    %324 = vmatpush1.msra.mxu0 0.0
    %325 = vmatprep.subr.mxu0 0.0
    %326 = vmatpush1.msra.mxu0 0.0
    %327 = vmatprep.mubr.f32.mxu0 0.0
    %328 = vmatmul.mubr.f32.gmra.mrb[0].mxu0 %v237
    %v329 = vpop.f32.mrb[0].mxu0
    %v330 = vadd.f32 %v261, %v329
    %v331 = vpop.f32.mrb[0].mxu0
    %332 = vdwg.mxu0
    %v333 = vxor.u32 %v330, 2147483648
    %v334 = vmul.f32 %v333, 1.442695
    %v335 = vpow.pop %v334
    %v336 = vadd.f32 %v335, 1.0
    %v337 = vrcp.pop %v336
    %v338 = vmul.f32 1.0, %v337
    %v339 = vmul.f32 %v330, %v338
    %v340 = vld [vmem:[%s5] sm:$0xff]
    %v341 = vld [vmem:[%s5 + $0x8] sm:$0xff]
    %v342 = vld [vmem:[%s5 + $0x10] sm:$0xff]
    %v343 = vld [vmem:[%s5 + $0x18] sm:$0xff]
    %v344 = vld [vmem:[%s5 + $0x20] sm:$0xff]
    %v345 = vld [vmem:[%s5 + $0x28] sm:$0xff]
    %v346 = vld [vmem:[%s5 + $0x30] sm:$0xff]
    %v347 = vld [vmem:[%s5 + $0x38] sm:$0xff]
    %v348 = vld [vmem:[%s5 + $0x40] sm:$0xff]
    %v349 = vld [vmem:[%s5 + $0x48] sm:$0xff]
    %v350 = vld [vmem:[%s5 + $0x50] sm:$0xff]
    %v351 = vld [vmem:[%s5 + $0x58] sm:$0xff]
    %v352 = vld [vmem:[%s5 + $0x60] sm:$0xff]
    %v353 = vld [vmem:[%s5 + $0x68] sm:$0xff]
    %v354 = vld [vmem:[%s5 + $0x70] sm:$0xff]
    %v355 = vld [vmem:[%s5 + $0x78] sm:$0xff]
    %v356 = vld [vmem:[%s6] sm:$0x1]
    %v358 = vlaneseq
    %v359 = vshrl.u32 %v358, 7
    %v360 = vsub.s32 0, %v359
    %v361 = vrot.slane %v356, %v360
    %363 = vmatprep.subr.mxu0 0.0
    %364 = vmatpush1.msra.mxu0 %v340
    %365 = vmatprep.subr.mxu0 0.0
    %366 = vmatpush1.msra.mxu0 %v341
    %367 = vmatprep.subr.mxu0 0.0
    %368 = vmatpush1.msra.mxu0 %v342
    %369 = vmatprep.subr.mxu0 0.0
    %370 = vmatpush1.msra.mxu0 %v343
    %371 = vmatprep.subr.mxu0 0.0
    %372 = vmatpush1.msra.mxu0 %v344
    %373 = vmatprep.subr.mxu0 0.0
    %374 = vmatpush1.msra.mxu0 %v345
    %375 = vmatprep.subr.mxu0 0.0
    %376 = vmatpush1.msra.mxu0 %v346
    %377 = vmatprep.subr.mxu0 0.0
    %378 = vmatpush1.msra.mxu0 %v347
    %379 = vmatprep.subr.mxu0 0.0
    %380 = vmatpush1.msra.mxu0 %v348
    %381 = vmatprep.subr.mxu0 0.0
    %382 = vmatpush1.msra.mxu0 %v349
    %383 = vmatprep.subr.mxu0 0.0
    %384 = vmatpush1.msra.mxu0 %v350
    %385 = vmatprep.subr.mxu0 0.0
    %386 = vmatpush1.msra.mxu0 %v351
    %387 = vmatprep.subr.mxu0 0.0
    %388 = vmatpush1.msra.mxu0 %v352
    %389 = vmatprep.subr.mxu0 0.0
    %390 = vmatpush1.msra.mxu0 %v353
    %391 = vmatprep.subr.mxu0 0.0
    %392 = vmatpush1.msra.mxu0 %v354
    %393 = vmatprep.subr.mxu0 0.0
    %394 = vmatpush1.msra.mxu0 %v355
    %395 = vmatprep.subr.mxu0 0.0
    %396 = vmatpush1.msra.mxu0 0.0
    %397 = vmatprep.subr.mxu0 0.0
    %398 = vmatpush1.msra.mxu0 0.0
    %399 = vmatprep.subr.mxu0 0.0
    %400 = vmatpush1.msra.mxu0 0.0
    %401 = vmatprep.subr.mxu0 0.0
    %402 = vmatpush1.msra.mxu0 0.0
    %403 = vmatprep.subr.mxu0 0.0
    %404 = vmatpush1.msra.mxu0 0.0
    %405 = vmatprep.subr.mxu0 0.0
    %406 = vmatpush1.msra.mxu0 0.0
    %407 = vmatprep.subr.mxu0 0.0
    %408 = vmatpush1.msra.mxu0 0.0
    %409 = vmatprep.subr.mxu0 0.0
    %410 = vmatpush1.msra.mxu0 0.0
    %411 = vmatprep.subr.mxu0 0.0
    %412 = vmatpush1.msra.mxu0 0.0
    %413 = vmatprep.subr.mxu0 0.0
    %414 = vmatpush1.msra.mxu0 0.0
    %415 = vmatprep.subr.mxu0 0.0
    %416 = vmatpush1.msra.mxu0 0.0
    %417 = vmatprep.subr.mxu0 0.0
    %418 = vmatpush1.msra.mxu0 0.0
    %419 = vmatprep.subr.mxu0 0.0
    %420 = vmatpush1.msra.mxu0 0.0
    %421 = vmatprep.subr.mxu0 0.0
    %422 = vmatpush1.msra.mxu0 0.0
    %423 = vmatprep.subr.mxu0 0.0
    %424 = vmatpush1.msra.mxu0 0.0
    %425 = vmatprep.subr.mxu0 0.0
    %426 = vmatpush1.msra.mxu0 0.0
    %427 = vmatprep.mubr.f32.mxu0 0.0
    %428 = vmatmul.mubr.f32.gmra.mrb[0].mxu0 %v339
    %v429 = vpop.f32.mrb[0].mxu0
    %v430 = vadd.f32 %v361, %v429
    %v431 = vpop.f32.mrb[0].mxu0
    %432 = vdwg.mxu0
    %v433 = vtanh.pop %v430
    %v434 = vmul.f32 %v433, 2.0
    %vm435 = vcmask 254976
    %436 = vst.msk [vmem:[#allocation5] sm:$0x3] %vm435, %v434
    // Predicated region
    $region34: #{tpu_custom_call.1} parent=1 // pred_check
      _
    $region35: #{tpu_custom_call.1} parent=1 // pred_check_branch
      %438 = sbr.rel (0) target = $region37
    $region36: #{tpu_custom_call.1} parent=1 // pred_region
      %s440 = ssub.s32 32, 32
      %441 = vsyncadd [#allocation4], %s440
      %s443 = sshll.u32 [#allocation5], 4
      %s444 = int_to_ptr.vmem [resolvable:$true] %s443
      %446 = dma.vmem_to_hbm [thread:$0]  %s444, 32, %s7, [#allocation4]
    $region37: #{tpu_custom_call.1} parent=1 // pred_fallthru
      _
    // Predicated region
    $region38: #{tpu_custom_call.1} parent=1 // pred_check
      _
    $region39: #{tpu_custom_call.1} parent=1 // pred_check_branch
      %448 = sbr.rel (0) target = $region41
    $region40: #{tpu_custom_call.1} parent=1 // pred_region
      %449 = dma.done [#allocation4], 32
    $region41: #{tpu_custom_call.1} parent=1 // pred_fallthru
      _
    %450 = vsyncpa [#allocation3], 1
    %451 = vsyncpa [#allocation4], 1

</llo_original>
